<compile_context>
chip_gen: v6e
topology: v6e:2x2x1
jax: 0.10.0
libtpu: 0.0.40
codegen_flags: <defaults>
</compile_context>

<pallas_src>
import functools

import jax
import jax.numpy as jnp
from jax.experimental import pallas as pl
from jax.experimental.pallas import tpu as pltpu

_SUBLANE = 16  # sublane alignment for batch tiles (covers f32 and bf16 outputs)


def _round_up(n: int, m: int) -> int:
    return ((n + m - 1) // m) * m


def qnet_kernel(x_ref, w1_ref, b1_ref, w2_ref, b2_ref, w3_ref, b3_ref, o_ref):
    """Fused Linear->ReLU->Linear->ReLU->Linear on one batch tile."""
    # Cast x to the compute dtype on the VMEM tile (cheap VPU op, hidden under MXU).
    x = x_ref[...].astype(w1_ref.dtype)
    # Layer 1: MXU matmul with f32 accumulation; bias/ReLU in f32 on the VPU.
    h1 = jnp.dot(x, w1_ref[...], preferred_element_type=jnp.float32)
    h1 = jnp.maximum(h1 + b1_ref[...], 0.0)
    # Layer 2
    h2 = jnp.dot(h1.astype(w2_ref.dtype), w2_ref[...],
                 preferred_element_type=jnp.float32)
    h2 = jnp.maximum(h2 + b2_ref[...], 0.0)
    # Layer 3 (no activation); output block is the full (un-padded) action dim.
    out = jnp.dot(h2.astype(w3_ref.dtype), w3_ref[...],
                  preferred_element_type=jnp.float32) + b3_ref[...]
    o_ref[...] = out.astype(o_ref.dtype)


def prepare_qnet_params(w1, b1, w2, b2, w3, b3, compute_dtype=jnp.bfloat16):
    """One-time weight prep (hoisted out of the per-call forward).

    Weights are cast to the MXU compute dtype; biases stay f32 (added on the VPU
    after the f32-accumulated matmul). Pass compute_dtype=jnp.float32 for an
    exact-f32 path matching a pure-f32 PyTorch QNet.
    """
    c = compute_dtype
    f32 = jnp.float32
    return (w1.astype(c), b1.astype(f32),
            w2.astype(c), b2.astype(f32),
            w3.astype(c), b3.astype(f32))


@functools.partial(jax.jit, static_argnames=("tile_b", "out_dtype"))
def qnet_forward(x, w1, b1, w2, b2, w3, b3, *, tile_b=1024, out_dtype=None):
    """Forward pass. Weights should come from prepare_qnet_params()."""
    B, S = x.shape
    H = w1.shape[1]
    A = w3.shape[1]
    if out_dtype is None:
        out_dtype = x.dtype

    # Batch tile: sublane-aligned, capped at ceil(B/2) so the grid has >=2 steps
    # for moderate batches (v7x dual-TC sharding; also limits padding waste).
    tile = min(tile_b, _round_up(pl.cdiv(B, 2), _SUBLANE))
    tile = _round_up(tile, _SUBLANE)
    B_pad = _round_up(B, tile)
    if B_pad != B:
        x = jnp.pad(x, ((0, B_pad - B), (0, 0)))

    # Weights/biases pinned VMEM-resident across grid steps (constant index_map).
    resident = lambda i: (0, 0)
    out = pl.pallas_call(
        qnet_kernel,
        out_shape=jax.ShapeDtypeStruct((B_pad, A), out_dtype),
        grid=(B_pad // tile,),
        in_specs=[
            pl.BlockSpec((tile, S), lambda i: (i, 0)),  # x (streamed over batch, f32)
            pl.BlockSpec((S, H), resident),             # w1
            pl.BlockSpec((1, H), resident),             # b1
            pl.BlockSpec((H, H), resident),             # w2
            pl.BlockSpec((1, H), resident),             # b2
            pl.BlockSpec((H, A), resident),             # w3 (un-padded: A = full dim)
            pl.BlockSpec((1, A), resident),             # b3
        ],
        out_specs=pl.BlockSpec((tile, A), lambda i: (i, 0)),
        compiler_params=pltpu.CompilerParams(
            dimension_semantics=("parallel",),          # shard batch across TCs (v7x)
        ),
    )(x, w1, b1, w2, b2, w3, b3)
    return out[:B]


def init_linear(key, fan_in, fan_out, dtype=jnp.float32):
    """Deterministic init mimicking nn.Linear default: U(-1/sqrt(fan_in), 1/sqrt(fan_in))."""
    kw, kb = jax.random.split(key)
    bound = 1.0 / jnp.sqrt(jnp.asarray(fan_in, dtype))
    # Stored pre-transposed: [in, out]
    w = jax.random.uniform(kw, (fan_in, fan_out), dtype, -bound, bound)
    b = jax.random.uniform(kb, (1, fan_out), dtype, -bound, bound)
    return w, b


def qnet_reference(x, w1, b1, w2, b2, w3, b3, compute_dtype=jnp.bfloat16):
    """Pure-JAX reference mirroring the kernel's mixed precision."""
    c = compute_dtype
    h1 = jnp.maximum(
        jnp.dot(x.astype(c), w1.astype(c), preferred_element_type=jnp.float32)
        + b1.astype(jnp.float32), 0.0)
    h2 = jnp.maximum(
        jnp.dot(h1.astype(c), w2.astype(c), preferred_element_type=jnp.float32)
        + b2.astype(jnp.float32), 0.0)
    return (jnp.dot(h2.astype(c), w3.astype(c), preferred_element_type=jnp.float32)
            + b3.astype(jnp.float32))


if __name__ == "__main__":
    # Shapes implied by QNet(state_size, action_size, hidden_size)
    batch = 2
    state_size = 16
    hidden_size = 32
    action_size = 8

    key = jax.random.PRNGKey(0)
    k_x, k1, k2, k3 = jax.random.split(key, 4)

    x = jax.random.normal(k_x, (batch, state_size), jnp.float32)
    w1, b1 = init_linear(k1, state_size, hidden_size)
    w2, b2 = init_linear(k2, hidden_size, hidden_size)
    w3, b3 = init_linear(k3, hidden_size, action_size)

    # --- bf16-MXU path (default) ---
    params_bf16 = prepare_qnet_params(w1, b1, w2, b2, w3, b3, jnp.bfloat16)
    out = jax.block_until_ready(qnet_forward(x, *params_bf16))
    ref = qnet_reference(x, w1, b1, w2, b2, w3, b3, jnp.bfloat16)
    assert out.shape == (batch, action_size), out.shape
    assert jnp.allclose(out, ref, atol=1e-2, rtol=1e-2), "mismatch vs reference (B=2)"

    # Multi-step grid + batch padding (B=40, tile_b=16 -> tile=16, grid=(3,)).
    xb = jax.random.normal(jax.random.PRNGKey(1), (40, state_size), jnp.float32)
    outb = jax.block_until_ready(qnet_forward(xb, *params_bf16, tile_b=16))
    refb = qnet_reference(xb, w1, b1, w2, b2, w3, b3, jnp.bfloat16)
    assert outb.shape == (40, action_size), outb.shape
    assert jnp.allclose(outb, refb, atol=1e-2, rtol=1e-2), "mismatch vs reference (B=40)"

    # bf16 output option (halves writeback on top of un-padded output).
    outh = jax.block_until_ready(
        qnet_forward(xb, *params_bf16, tile_b=16, out_dtype=jnp.bfloat16))
    assert outh.dtype == jnp.bfloat16
    assert jnp.allclose(outh.astype(jnp.float32), refb, atol=3e-2, rtol=3e-2), \
        "mismatch vs reference (bf16 out)"

    # Exact f32 fallback path (matches a pure-f32 PyTorch QNet to f32 precision).
    params_f32 = prepare_qnet_params(w1, b1, w2, b2, w3, b3, jnp.float32)
    outf = jax.block_until_ready(qnet_forward(xb, *params_f32, tile_b=16))
    reff = qnet_reference(xb, w1, b1, w2, b2, w3, b3, jnp.float32)
    assert jnp.allclose(outf, reff, atol=1e-5, rtol=1e-5), "mismatch vs f32 reference"

    print("KERNEL_OK")
</pallas_src>

<mosaic_0001>
module attributes {stable_mosaic.version = 11 : i64} {
  func.func @qnet_kernel(%arg0: i32, %arg1: memref<16x16xf32, #tpu.memory_space<vmem>>, %arg2: memref<16x32xbf16, #tpu.memory_space<vmem>>, %arg3: memref<1x32xf32, #tpu.memory_space<vmem>>, %arg4: memref<32x32xbf16, #tpu.memory_space<vmem>>, %arg5: memref<1x32xf32, #tpu.memory_space<vmem>>, %arg6: memref<32x8xbf16, #tpu.memory_space<vmem>>, %arg7: memref<1x8xf32, #tpu.memory_space<vmem>>, %arg8: memref<16x8xf32, #tpu.memory_space<vmem>>) attributes {dimension_semantics = [#tpu.dimension_semantics<parallel>], iteration_bounds = array<i64: 1>, scalar_prefetch = 0 : i64, scratch_operands = 0 : i64, tpu.core_type = #tpu.core_type<tc>, window_params = [{transform_indices = @transform_0, window_bounds = array<i64: 16, 16>}, {pipeline_mode = #tpu.pipeline_mode<synchronous>, transform_indices = @transform_1, window_bounds = array<i64: 16, 32>}, {pipeline_mode = #tpu.pipeline_mode<synchronous>, transform_indices = @transform_2, window_bounds = array<i64: 1, 32>}, {pipeline_mode = #tpu.pipeline_mode<synchronous>, transform_indices = @transform_3, window_bounds = array<i64: 32, 32>}, {pipeline_mode = #tpu.pipeline_mode<synchronous>, transform_indices = @transform_4, window_bounds = array<i64: 1, 32>}, {pipeline_mode = #tpu.pipeline_mode<synchronous>, transform_indices = @transform_5, window_bounds = array<i64: 32, 8>}, {pipeline_mode = #tpu.pipeline_mode<synchronous>, transform_indices = @transform_6, window_bounds = array<i64: 1, 8>}, {transform_indices = @transform_7, window_bounds = array<i64: 16, 8>}]} {
    %c0 = arith.constant 0 : index
    %c0_0 = arith.constant 0 : index
    %0 = vector.load %arg1[%c0, %c0_0] : memref<16x16xf32, #tpu.memory_space<vmem>>, vector<16x16xf32>
    %1 = arith.truncf %0 : vector<16x16xf32> to vector<16x16xbf16>
    %c0_1 = arith.constant 0 : index
    %c0_2 = arith.constant 0 : index
    %2 = vector.load %arg2[%c0_1, %c0_2] : memref<16x32xbf16, #tpu.memory_space<vmem>>, vector<16x32xbf16>
    %cst = arith.constant dense<0.000000e+00> : vector<16x32xf32>
    %3 = tpu.matmul %1, %2, %cst {dimension_numbers = #tpu.dot_dimension_numbers<[1], [0], [0], [1], [0, 0, 1, 1], [], []>} : vector<16x16xbf16>, vector<16x32xbf16>, vector<16x32xf32> -> vector<16x32xf32>
    %c0_3 = arith.constant 0 : index
    %c0_4 = arith.constant 0 : index
    %4 = vector.load %arg3[%c0_3, %c0_4] : memref<1x32xf32, #tpu.memory_space<vmem>>, vector<1x32xf32>
    %5 = vector.broadcast %4 : vector<1x32xf32> to vector<16x32xf32>
    %6 = arith.addf %3, %5 : vector<16x32xf32>
    %cst_5 = arith.constant 0.000000e+00 : f32
    %7 = vector.broadcast %cst_5 : f32 to vector<16x32xf32>
    %8 = arith.maximumf %6, %7 : vector<16x32xf32>
    %9 = arith.truncf %8 : vector<16x32xf32> to vector<16x32xbf16>
    %c0_6 = arith.constant 0 : index
    %c0_7 = arith.constant 0 : index
    %10 = vector.load %arg4[%c0_6, %c0_7] : memref<32x32xbf16, #tpu.memory_space<vmem>>, vector<32x32xbf16>
    %cst_8 = arith.constant dense<0.000000e+00> : vector<16x32xf32>
    %11 = tpu.matmul %9, %10, %cst_8 {dimension_numbers = #tpu.dot_dimension_numbers<[1], [0], [0], [1], [0, 0, 1, 1], [], []>} : vector<16x32xbf16>, vector<32x32xbf16>, vector<16x32xf32> -> vector<16x32xf32>
    %c0_9 = arith.constant 0 : index
    %c0_10 = arith.constant 0 : index
    %12 = vector.load %arg5[%c0_9, %c0_10] : memref<1x32xf32, #tpu.memory_space<vmem>>, vector<1x32xf32>
    %13 = vector.broadcast %12 : vector<1x32xf32> to vector<16x32xf32>
    %14 = arith.addf %11, %13 : vector<16x32xf32>
    %cst_11 = arith.constant 0.000000e+00 : f32
    %15 = vector.broadcast %cst_11 : f32 to vector<16x32xf32>
    %16 = arith.maximumf %14, %15 : vector<16x32xf32>
    %17 = arith.truncf %16 : vector<16x32xf32> to vector<16x32xbf16>
    %c0_12 = arith.constant 0 : index
    %c0_13 = arith.constant 0 : index
    %18 = vector.load %arg6[%c0_12, %c0_13] : memref<32x8xbf16, #tpu.memory_space<vmem>>, vector<32x8xbf16>
    %cst_14 = arith.constant dense<0.000000e+00> : vector<16x8xf32>
    %19 = tpu.matmul %17, %18, %cst_14 {dimension_numbers = #tpu.dot_dimension_numbers<[1], [0], [0], [1], [0, 0, 1, 1], [], []>} : vector<16x32xbf16>, vector<32x8xbf16>, vector<16x8xf32> -> vector<16x8xf32>
    %c0_15 = arith.constant 0 : index
    %c0_16 = arith.constant 0 : index
    %20 = vector.load %arg7[%c0_15, %c0_16] : memref<1x8xf32, #tpu.memory_space<vmem>>, vector<1x8xf32>
    %21 = vector.broadcast %20 : vector<1x8xf32> to vector<16x8xf32>
    %22 = arith.addf %19, %21 : vector<16x8xf32>
    %c0_17 = arith.constant 0 : index
    %c0_18 = arith.constant 0 : index
    %23 = vector.load %arg8[%c0_17, %c0_18] : memref<16x8xf32, #tpu.memory_space<vmem>>, vector<16x8xf32>
    tpu.vector_store %arg8[%c0_17, %c0_18], %22 {strides = array<i32>} : memref<16x8xf32, #tpu.memory_space<vmem>>, vector<16x8xf32>,
    return
  }
  func.func @transform_0(%arg0: i32) -> (i32, i32) {
    %c0_i32 = arith.constant 0 : i32
    %c0_i32_0 = arith.constant 0 : i32
    return %arg0, %c0_i32 : i32, i32
  }
  func.func @transform_1(%arg0: i32) -> (i32, i32) {
    %c0_i32 = arith.constant 0 : i32
    %c0_i32_0 = arith.constant 0 : i32
    %c0_i32_1 = arith.constant 0 : i32
    return %c0_i32, %c0_i32_0 : i32, i32
  }
  func.func @transform_2(%arg0: i32) -> (i32, i32) {
    %c0_i32 = arith.constant 0 : i32
    %c0_i32_0 = arith.constant 0 : i32
    %c0_i32_1 = arith.constant 0 : i32
    return %c0_i32, %c0_i32_0 : i32, i32
  }
  func.func @transform_3(%arg0: i32) -> (i32, i32) {
    %c0_i32 = arith.constant 0 : i32
    %c0_i32_0 = arith.constant 0 : i32
    %c0_i32_1 = arith.constant 0 : i32
    return %c0_i32, %c0_i32_0 : i32, i32
  }
  func.func @transform_4(%arg0: i32) -> (i32, i32) {
    %c0_i32 = arith.constant 0 : i32
    %c0_i32_0 = arith.constant 0 : i32
    %c0_i32_1 = arith.constant 0 : i32
    return %c0_i32, %c0_i32_0 : i32, i32
  }
  func.func @transform_5(%arg0: i32) -> (i32, i32) {
    %c0_i32 = arith.constant 0 : i32
    %c0_i32_0 = arith.constant 0 : i32
    %c0_i32_1 = arith.constant 0 : i32
    return %c0_i32, %c0_i32_0 : i32, i32
  }
  func.func @transform_6(%arg0: i32) -> (i32, i32) {
    %c0_i32 = arith.constant 0 : i32
    %c0_i32_0 = arith.constant 0 : i32
    %c0_i32_1 = arith.constant 0 : i32
    return %c0_i32, %c0_i32_0 : i32, i32
  }
  func.func @transform_7(%arg0: i32) -> (i32, i32) {
    %c0_i32 = arith.constant 0 : i32
    %c0_i32_0 = arith.constant 0 : i32
    return %arg0, %c0_i32 : i32, i32
  }
}

</mosaic_0001>

<llo_original>
// kernel: qnet_forward.1
$region0: #{qnet_forward.1}
  #allocation0 [shape = 'u32[]', space=smem, size = 0x4, offset = 0x4, fixed_abs, tag = 'smem constant byte address 0x4 - core index']
  #allocation1 [shape = 'u32[144,128]{1,0:T(1,128)}', space=vmem, size = 0x12000, scoped, tag = 'internal scratch']
  %s0 = inlined_call_operand.vmem [shape: f32[16,16], index: 0, kind: input, shape index: {}]
  %s1 = inlined_call_operand.vmem [shape: bf16[16,32], index: 1, kind: input, shape index: {}]
  %s2 = inlined_call_operand.vmem [shape: f32[1,32], index: 2, kind: input, shape index: {}]
  %s3 = inlined_call_operand.vmem [shape: bf16[32,32], index: 3, kind: input, shape index: {}]
  %s4 = inlined_call_operand.vmem [shape: f32[1,32], index: 4, kind: input, shape index: {}]
  %s5 = inlined_call_operand.vmem [shape: bf16[32,8], index: 5, kind: input, shape index: {}]
  %s6 = inlined_call_operand.vmem [shape: f32[1,8], index: 6, kind: input, shape index: {}]
  %s7 = inlined_call_operand.vmem [shape: f32[16,8], index: 7, kind: output, shape index: {}]
  %s8 = sld [smem:[#allocation0]]
  $region38: #{qnet_forward.1} parent=0
    _
  %s10 = ssub.s32 1, %s8
  %s11 = scalar_select 0, %s10, %s8
  // Predicated region
  $region2: #{qnet_forward.1} parent=0 // pred_check
    _
  $region3: #{qnet_forward.1} parent=0 // pred_check_branch
    %13 = sbr.rel (0) target = $region5
  $region4: #{qnet_forward.1} parent=0 // pred_region
    _
  $region5: #{qnet_forward.1} parent=0 // pred_fallthru
    _
  // Predicated region
  $region6: #{qnet_forward.1} parent=0 // pred_check
    _
  $region7: #{qnet_forward.1} parent=0 // pred_check_branch
    %15 = sbr.rel (0) target = $region9
  $region8: #{qnet_forward.1} parent=0 // pred_region
    _
  $region9: #{qnet_forward.1} parent=0 // pred_fallthru
    _
  // Predicated region
  $region10: #{qnet_forward.1} parent=0 // pred_check
    _
  $region11: #{qnet_forward.1} parent=0 // pred_check_branch
    %17 = sbr.rel (0) target = $region13
  $region12: #{qnet_forward.1} parent=0 // pred_region
    _
  $region13: #{qnet_forward.1} parent=0 // pred_fallthru
    _
  // Predicated region
  $region14: #{qnet_forward.1} parent=0 // pred_check
    _
  $region15: #{qnet_forward.1} parent=0 // pred_check_branch
    %19 = sbr.rel (0) target = $region17
  $region16: #{qnet_forward.1} parent=0 // pred_region
    _
  $region17: #{qnet_forward.1} parent=0 // pred_fallthru
    _
  // Predicated region
  $region18: #{qnet_forward.1} parent=0 // pred_check
    _
  $region19: #{qnet_forward.1} parent=0 // pred_check_branch
    %21 = sbr.rel (0) target = $region21
  $region20: #{qnet_forward.1} parent=0 // pred_region
    _
  $region21: #{qnet_forward.1} parent=0 // pred_fallthru
    _
  // Predicated region
  $region22: #{qnet_forward.1} parent=0 // pred_check
    _
  $region23: #{qnet_forward.1} parent=0 // pred_check_branch
    %23 = sbr.rel (0) target = $region25
  $region24: #{qnet_forward.1} parent=0 // pred_region
    _
  $region25: #{qnet_forward.1} parent=0 // pred_fallthru
    _
  // Predicated region
  $region26: #{qnet_forward.1} parent=0 // pred_check
    _
  $region27: #{qnet_forward.1} parent=0 // pred_check_branch
    %25 = sbr.rel (0) target = $region29
  $region28: #{qnet_forward.1} parent=0 // pred_region
    _
  $region29: #{qnet_forward.1} parent=0 // pred_fallthru
    _
  %v27 = vld [vmem:[%s0] sm:$0xff]
  %v28 = vld [vmem:[%s0 + $0x8] sm:$0xff]
  %v29 = vpack.c.bf16 %v28, %v27
  %v30 = vld [vmem:[%s1] sm:$0xf]
  %v31 = vld [vmem:[%s1 + $0x4] sm:$0xf]
  %v32 = vld [vmem:[%s2] sm:$0x1]
  %v34 = vlaneseq
  %v35 = vshrl.u32 %v34, 7
  %v36 = vsub.s32 0, %v35
  %v37 = vrot.slane %v32, %v36
  %v41 = vunpack.c.l.b16 %v30
  %v42 = vunpack.c.l.b16 %v31
  %v43 = vpack.c.b16 %v42, %v41
  %vm45 = vcmask 130048
  %v47 = vsel %vm45, %v29, 0
  %49 = vmatprep.subr.bf16.mxu0 0
  %50 = vmatpush1.bf16.msra.mxu0 0
  %51 = vmatprep.subr.bf16.mxu0 0
  %52 = vmatpush1.bf16.msra.mxu0 0
  %53 = vmatprep.subr.bf16.mxu0 0
  %54 = vmatpush1.bf16.msra.mxu0 0
  %55 = vmatprep.subr.bf16.mxu0 0
  %56 = vmatpush1.bf16.msra.mxu0 0
  %57 = vmatprep.subr.bf16.mxu0 0
  %58 = vmatpush1.bf16.msra.mxu0 0
  %59 = vmatprep.subr.bf16.mxu0 0
  %60 = vmatpush1.bf16.msra.mxu0 0
  %61 = vmatprep.subr.bf16.mxu0 0
  %62 = vmatpush1.bf16.msra.mxu0 0
  %63 = vmatprep.subr.bf16.mxu0 0
  %64 = vmatpush1.bf16.msra.mxu0 %v43
  %65 = vmatprep.subr.bf16.mxu0 0
  %66 = vmatpush2.bf16.msra.mxu0 0
  %67 = vmatprep.subr.bf16.mxu0 0
  %68 = vmatpush2.bf16.msra.mxu0 0
  %69 = vmatprep.subr.bf16.mxu0 0
  %70 = vmatpush2.bf16.msra.mxu0 0
  %71 = vmatprep.subr.bf16.mxu0 0
  %72 = vmatpush2.bf16.msra.mxu0 0
  %73 = vmatprep.subr.bf16.mxu0 0
  %74 = vmatpush2.bf16.msra.mxu0 0
  %75 = vmatprep.subr.bf16.mxu0 0
  %76 = vmatpush2.bf16.msra.mxu0 0
  %77 = vmatprep.subr.bf16.mxu0 0
  %78 = vmatpush2.bf16.msra.mxu0 0
  %79 = vmatprep.subr.bf16.mxu0 0
  %80 = vmatpush2.bf16.msra.mxu0 0
  %81 = vmatprep.mubr.bf16.mxu0 0
  %82 = vmatmul.mubr.bf16.gmra.mxu0 %v47
  %v83 = vpop.f32.mrf.mxu0
  %v84 = vadd.f32 %v37, %v83
  %v85 = vpop.f32.mrf.mxu0
  %v86 = vpop.f32.mrf.mxu0
  %v87 = vadd.f32 %v37, %v86
  %v88 = vpop.f32.mrf.mxu0
  %89 = vdwg.mxu0
  %v90 = vmax.f32 %v84, 0.0
  %v91 = vmax.f32 %v87, 0.0
  %v92 = vpack.c.bf16 %v91, %v90
  %v93 = vld [vmem:[%s3] sm:$0xf]
  %v94 = vld [vmem:[%s3 + $0x4] sm:$0xf]
  %v95 = vld [vmem:[%s3 + $0x8] sm:$0xf]
  %v96 = vld [vmem:[%s3 + $0xc] sm:$0xf]
  %v97 = vld [vmem:[%s4] sm:$0x1]
  %v99 = vlaneseq
  %v100 = vshrl.u32 %v99, 7
  %v101 = vsub.s32 0, %v100
  %v102 = vrot.slane %v97, %v101
  %v108 = vunpack.c.l.b16 %v93
  %v109 = vunpack.c.l.b16 %v94
  %v110 = vunpack.c.l.b16 %v95
  %v111 = vunpack.c.l.b16 %v96
  %v112 = vpack.c.b16 %v109, %v108
  %v113 = vpack.c.b16 %v111, %v110
  %vm116 = vcmask 261120
  %v118 = vsel %vm116, %v92, 0
  %120 = vmatprep.subr.bf16.mxu0 0
  %121 = vmatpush1.bf16.msra.mxu0 0
  %122 = vmatprep.subr.bf16.mxu0 0
  %123 = vmatpush1.bf16.msra.mxu0 0
  %124 = vmatprep.subr.bf16.mxu0 0
  %125 = vmatpush1.bf16.msra.mxu0 0
  %126 = vmatprep.subr.bf16.mxu0 0
  %127 = vmatpush1.bf16.msra.mxu0 0
  %128 = vmatprep.subr.bf16.mxu0 0
  %129 = vmatpush1.bf16.msra.mxu0 0
  %130 = vmatprep.subr.bf16.mxu0 0
  %131 = vmatpush1.bf16.msra.mxu0 0
  %132 = vmatprep.subr.bf16.mxu0 0
  %133 = vmatpush1.bf16.msra.mxu0 %v113
  %134 = vmatprep.subr.bf16.mxu0 0
  %135 = vmatpush1.bf16.msra.mxu0 %v112
  %136 = vmatprep.subr.bf16.mxu0 0
  %137 = vmatpush2.bf16.msra.mxu0 0
  %138 = vmatprep.subr.bf16.mxu0 0
  %139 = vmatpush2.bf16.msra.mxu0 0
  %140 = vmatprep.subr.bf16.mxu0 0
  %141 = vmatpush2.bf16.msra.mxu0 0
  %142 = vmatprep.subr.bf16.mxu0 0
  %143 = vmatpush2.bf16.msra.mxu0 0
  %144 = vmatprep.subr.bf16.mxu0 0
  %145 = vmatpush2.bf16.msra.mxu0 0
  %146 = vmatprep.subr.bf16.mxu0 0
  %147 = vmatpush2.bf16.msra.mxu0 0
  %148 = vmatprep.subr.bf16.mxu0 0
  %149 = vmatpush2.bf16.msra.mxu0 0
  %150 = vmatprep.subr.bf16.mxu0 0
  %151 = vmatpush2.bf16.msra.mxu0 0
  %152 = vmatprep.mubr.bf16.mxu0 0
  %153 = vmatmul.mubr.bf16.gmra.mxu0 %v118
  %v154 = vpop.f32.mrf.mxu0
  %v155 = vadd.f32 %v102, %v154
  %v156 = vpop.f32.mrf.mxu0
  %v157 = vpop.f32.mrf.mxu0
  %v158 = vadd.f32 %v102, %v157
  %v159 = vpop.f32.mrf.mxu0
  %160 = vdwg.mxu0
  %v161 = vmax.f32 %v155, 0.0
  %v162 = vmax.f32 %v158, 0.0
  %v163 = vpack.c.bf16 %v162, %v161
  %v164 = vld [vmem:[%s5] sm:$0xf]
  %v165 = vld [vmem:[%s5 + $0x4] sm:$0xf]
  %v166 = vld [vmem:[%s5 + $0x8] sm:$0xf]
  %v167 = vld [vmem:[%s5 + $0xc] sm:$0xf]
  %v168 = vld [vmem:[%s6] sm:$0x1]
  %v170 = vlaneseq
  %v171 = vshrl.u32 %v170, 7
  %v172 = vsub.s32 0, %v171
  %v173 = vrot.slane %v168, %v172
  %v179 = vunpack.c.l.b16 %v164
  %v180 = vunpack.c.l.b16 %v165
  %v181 = vunpack.c.l.b16 %v166
  %v182 = vunpack.c.l.b16 %v167
  %v183 = vpack.c.b16 %v180, %v179
  %v184 = vpack.c.b16 %v182, %v181
  %v188 = vsel %vm116, %v163, 0
  %190 = vmatprep.subr.bf16.mxu0 0
  %191 = vmatpush1.bf16.msra.mxu0 0
  %192 = vmatprep.subr.bf16.mxu0 0
  %193 = vmatpush1.bf16.msra.mxu0 0
  %194 = vmatprep.subr.bf16.mxu0 0
  %195 = vmatpush1.bf16.msra.mxu0 0
  %196 = vmatprep.subr.bf16.mxu0 0
  %197 = vmatpush1.bf16.msra.mxu0 0
  %198 = vmatprep.subr.bf16.mxu0 0
  %199 = vmatpush1.bf16.msra.mxu0 0
  %200 = vmatprep.subr.bf16.mxu0 0
  %201 = vmatpush1.bf16.msra.mxu0 0
  %202 = vmatprep.subr.bf16.mxu0 0
  %203 = vmatpush1.bf16.msra.mxu0 %v184
  %204 = vmatprep.subr.bf16.mxu0 0
  %205 = vmatpush1.bf16.msra.mxu0 %v183
  %206 = vmatprep.subr.bf16.mxu0 0
  %207 = vmatpush2.bf16.msra.mxu0 0
  %208 = vmatprep.subr.bf16.mxu0 0
  %209 = vmatpush2.bf16.msra.mxu0 0
  %210 = vmatprep.subr.bf16.mxu0 0
  %211 = vmatpush2.bf16.msra.mxu0 0
  %212 = vmatprep.subr.bf16.mxu0 0
  %213 = vmatpush2.bf16.msra.mxu0 0
  %214 = vmatprep.subr.bf16.mxu0 0
  %215 = vmatpush2.bf16.msra.mxu0 0
  %216 = vmatprep.subr.bf16.mxu0 0
  %217 = vmatpush2.bf16.msra.mxu0 0
  %218 = vmatprep.subr.bf16.mxu0 0
  %219 = vmatpush2.bf16.msra.mxu0 0
  %220 = vmatprep.subr.bf16.mxu0 0
  %221 = vmatpush2.bf16.msra.mxu0 0
  %222 = vmatprep.mubr.bf16.mxu0 0
  %223 = vmatmul.mubr.bf16.gmra.mxu0 %v188
  %v224 = vpop.f32.mrf.mxu0
  %v225 = vadd.f32 %v173, %v224
  %v226 = vpop.f32.mrf.mxu0
  %v227 = vpop.f32.mrf.mxu0
  %v228 = vadd.f32 %v173, %v227
  %v229 = vpop.f32.mrf.mxu0
  %230 = vdwg.mxu0
  %vm231 = vcmask 64512
  %232 = vst.msk [vmem:[%s7] sm:$0xff] %vm231, %v225
  %233 = vst.msk [vmem:[%s7 + $0x8] sm:$0xff] %vm231, %v228
  // Predicated region
  $region30: #{qnet_forward.1} parent=0 // pred_check
    _
  $region31: #{qnet_forward.1} parent=0 // pred_check_branch
    %235 = sbr.rel (0) target = $region33
  $region32: #{qnet_forward.1} parent=0 // pred_region
    _
  $region33: #{qnet_forward.1} parent=0 // pred_fallthru
    _
  // Predicated region
  $region34: #{qnet_forward.1} parent=0 // pred_check
    _
  $region35: #{qnet_forward.1} parent=0 // pred_check_branch
    %237 = sbr.rel (0) target = $region37
  $region36: #{qnet_forward.1} parent=0 // pred_region
    _
  $region37: #{qnet_forward.1} parent=0 // pred_fallthru
    _

</llo_original>
